<compile_context>
chip_gen: v6e
topology: v6e:2x2x1
jax: 0.10.0
libtpu: 0.0.40
codegen_flags: <defaults>
</compile_context>

<pallas_src>
import jax
import jax.numpy as jnp
from jax.experimental import pallas as pl
from jax.experimental.pallas import tpu as pltpu


# ---------------------------------------------------------------------------
# helpers
# ---------------------------------------------------------------------------

def _vmem_capacity_bytes() -> int:
    """Per-core VMEM capacity; fall back to the smallest (v7x, 64 MiB) if unknown."""
    try:
        return int(pltpu.get_tpu_info().vmem_capacity_bytes)
    except Exception:
        return 64 << 20


def _spec(block_shape, index_map, single_buffer=False):
    """BlockSpec; grid-invariant (resident) operands request single buffering."""
    if single_buffer:
        try:
            return pl.BlockSpec(block_shape, index_map, pipeline_mode=pl.Buffered(1))
        except Exception:          # pipeline_mode not supported -> plain (double-buffered)
            pass
    return pl.BlockSpec(block_shape, index_map)


# ---------------------------------------------------------------------------
# kernel 1: "rows" layout (small enc_in) — F on lanes everywhere
# ---------------------------------------------------------------------------

def _rows_kernel(x_ref, wt_ref, p_ref, o_ref):
    # x_ref : [TM, P]   one (batch, channel) series per row
    # wt_ref: [P, F]    transposed nn.Linear weight (resident across the grid)
    # p_ref : [2, F]    row 0 = 1 - rowsum(W), row 1 = bias (resident)
    # o_ref : [TM, F]
    x = x_ref[...]
    xf = x.astype(jnp.float32)                                        # stats in f32
    p = xf.shape[-1]
    mean = jnp.sum(xf, axis=-1, keepdims=True) * (1.0 / p)            # [TM, 1]
    d = xf - mean                                                     # two-pass variance
    var = jnp.sum(d * d, axis=-1, keepdims=True) * (1.0 / (p - 1))    # ddof=1 (torch.std)
    std = jnp.sqrt(var)                                               # [TM, 1]  (EUP)

    # MXU: native-dtype operands, f32 accumulation; N dim = F (lane-dense).
    y = jnp.dot(x, wt_ref[...], preferred_element_type=jnp.float32)   # [TM, F]
    # folded de-normalization: two rank-1 broadcast updates
    y = y + mean * p_ref[0:1, :] + std * p_ref[1:2, :]
    o_ref[...] = y.astype(o_ref.dtype)


def _rows_forward(x, weight, bias):
    B, P, C = x.shape
    F = weight.shape[0]
    M = B * C
    itemsize = jnp.dtype(x.dtype).itemsize

    # layout plumbing (wrapper side, fused by XLA under jit)
    xr = jnp.transpose(x, (0, 2, 1)).reshape(M, P)                    # [B*C, P]
    wt = weight.T                                                     # [P, F]
    params = jnp.stack([1.0 - jnp.sum(weight, axis=1), bias]).astype(jnp.float32)  # [2, F]

    # generation-aware tile sizing (v7x: 64 MiB VMEM, v5e/v6e: 128 MiB)
    vmem = _vmem_capacity_bytes()
    budget = int(0.4 * vmem)
    w_itemsize = jnp.dtype(wt.dtype).itemsize
    resident = 2 * (P * F * w_itemsize + 2 * 128 * 4)                 # weight + params
    per_row = (2 * P + 2 * F) * itemsize + (2 * P + 2 * F) * 4        # blocks + f32 temps
    tm = (budget - resident) // max(per_row, 1)
    tm = int(max(8, min(tm, 1024)))
    tm = (tm // 8) * 8
    if tm >= M:
        tm = M                                                        # single row block
    grid = (pl.cdiv(M, tm),)                                          # edge block is clipped

    est = resident + tm * per_row
    vmem_limit = int(min(0.9 * vmem, max(16 << 20, 1.5 * est)))
    single_buffer = P * F * w_itemsize >= (256 << 10)

    out = pl.pallas_call(
        _rows_kernel,
        out_shape=jax.ShapeDtypeStruct((M, F), x.dtype),
        grid=grid,
        in_specs=[
            pl.BlockSpec((tm, P), lambda i: (i, 0)),                  # x row tile
            _spec((P, F), lambda i: (0, 0), single_buffer),           # weight^T (resident)
            _spec((2, F), lambda i: (0, 0), single_buffer),           # packed params
        ],
        out_specs=pl.BlockSpec((tm, F), lambda i: (i, 0)),
        compiler_params=pltpu.CompilerParams(
            dimension_semantics=("parallel",),
            vmem_limit_bytes=vmem_limit,
        ),
    )(xr, wt, params)
    return jnp.transpose(out.reshape(B, C, F), (0, 2, 1))             # -> [B, F, C]


# ---------------------------------------------------------------------------
# kernel 2: native layout (large enc_in) — channel tiles, no wrapper transposes
# ---------------------------------------------------------------------------

def _native_kernel(x_ref, w_ref, p_ref, o_ref):
    # x_ref: [1, P, TC]; w_ref: [F, P]; p_ref: [F, 2] (col0 = 1-rowsum(W), col1 = bias)
    # o_ref: [1, F, TC]  — already in the PyTorch [B, F, C] layout
    x = x_ref[0]                                                      # [P, TC]
    xf = x.astype(jnp.float32)
    p = xf.shape[0]
    mean = jnp.sum(xf, axis=0, keepdims=True) * (1.0 / p)             # [1, TC]
    d = xf - mean
    var = jnp.sum(d * d, axis=0, keepdims=True) * (1.0 / (p - 1))
    std = jnp.sqrt(var)                                               # [1, TC]

    y = jnp.dot(w_ref[...], x, preferred_element_type=jnp.float32)    # [F, TC] (MXU)
    y = y + p_ref[:, 0:1] * mean + p_ref[:, 1:2] * std                # rank-1 updates
    o_ref[0] = y.astype(o_ref.dtype)


def _native_forward(x, weight, bias):
    B, P, C = x.shape
    F = weight.shape[0]
    itemsize = jnp.dtype(x.dtype).itemsize
    w_itemsize = jnp.dtype(weight.dtype).itemsize

    vmem = _vmem_capacity_bytes()
    budget = int(0.4 * vmem)
    resident = 2 * (F * P * w_itemsize + F * 128 * 4)
    per_chan = (2 * P + 2 * F) * itemsize + (2 * P + 2 * F) * 4
    tc_cap = max(128, ((budget - resident) // max(per_chan, 1)) // 128 * 128)

    # largest multiple of 128 (within the VMEM cap) that divides C
    tc = None
    cand = (min(tc_cap, C) // 128) * 128
    while cand >= 128:
        if C % cand == 0:
            tc = cand
            break
        cand -= 128
    if tc is None:
        # no 128-multiple divisor: take the full extent if it fits, else tile at the
        # cap and let Pallas clip the edge block (channels are independent).
        tc = C if (resident + C * per_chan) <= budget else max(128, (min(tc_cap, C) // 128) * 128)

    params = jnp.stack([1.0 - jnp.sum(weight, axis=1), bias], axis=1).astype(jnp.float32)  # [F, 2]
    est = resident + tc * per_chan
    vmem_limit = int(min(0.9 * vmem, max(16 << 20, 1.5 * est)))
    single_buffer = F * P * w_itemsize >= (256 << 10)

    grid = (B, pl.cdiv(C, tc))                                        # both parallel (megacore)
    return pl.pallas_call(
        _native_kernel,
        out_shape=jax.ShapeDtypeStruct((B, F, C), x.dtype),
        grid=grid,
        in_specs=[
            pl.BlockSpec((1, P, tc), lambda b, c: (b, 0, c)),         # x tile (native layout)
            _spec((F, P), lambda b, c: (0, 0), single_buffer),        # weight (resident)
            _spec((F, 2), lambda b, c: (0, 0), single_buffer),        # packed params
        ],
        out_specs=pl.BlockSpec((1, F, tc), lambda b, c: (b, 0, c)),
        compiler_params=pltpu.CompilerParams(
            dimension_semantics=("parallel", "parallel"),
            vmem_limit_bytes=vmem_limit,
        ),
    )(x, weight, params)


# ---------------------------------------------------------------------------
# public entry point
# ---------------------------------------------------------------------------

@jax.jit
def model_forward(x, weight, bias):
    """x: [B, P, C] (batch, seq_len, enc_in); weight: [F, P]; bias: [F] -> [B, F, C]."""
    _, _, C = x.shape
    if C >= 128:
        return _native_forward(x, weight, bias)
    return _rows_forward(x, weight, bias)


if __name__ == "__main__":
    # configs: seq_len = pred_len = 16, enc_in = 4, batch = 2
    B, P, F, C = 2, 16, 16, 4

    key = jax.random.PRNGKey(0)
    kx, kw, kb = jax.random.split(key, 3)

    x = jax.random.normal(kx, (B, P, C), dtype=jnp.float32)
    # deterministic nn.Linear-style init: U(-1/sqrt(P), 1/sqrt(P))
    bound = 1.0 / (P ** 0.5)
    weight = jax.random.uniform(kw, (F, P), minval=-bound, maxval=bound, dtype=jnp.float32)
    bias = jax.random.uniform(kb, (F,), minval=-bound, maxval=bound, dtype=jnp.float32)

    out = jax.block_until_ready(model_forward(x, weight, bias))

    # plain-JAX reference of the original (un-folded) PyTorch math
    xt = jnp.transpose(x, (0, 2, 1))                                  # [B, C, P]
    E = jnp.mean(xt, axis=-1, keepdims=True)
    S = jnp.std(xt, axis=-1, keepdims=True, ddof=1)
    ref = ((xt - E) / S) @ weight.T + bias
    ref = ref * S + E
    ref = jnp.transpose(ref, (0, 2, 1))                               # [B, F, C]

    assert out.shape == (B, F, C)
    err = float(jnp.max(jnp.abs(out - ref)))
    assert err < 1e-4, err
    print("KERNEL_OK")
</pallas_src>

<mosaic_0001>
module attributes {stable_mosaic.version = 11 : i64} {
  func.func @_rows_kernel(%arg0: i32, %arg1: memref<8x16xf32, #tpu.memory_space<vmem>>, %arg2: memref<16x16xf32, #tpu.memory_space<vmem>>, %arg3: memref<2x16xf32, #tpu.memory_space<vmem>>, %arg4: memref<8x16xf32, #tpu.memory_space<vmem>>) attributes {dimension_semantics = [#tpu.dimension_semantics<parallel>], iteration_bounds = array<i64: 1>, scalar_prefetch = 0 : i64, scratch_operands = 0 : i64, tpu.core_type = #tpu.core_type<tc>, window_params = [{transform_indices = @transform_0, window_bounds = array<i64: 8, 16>}, {pipeline_mode = #tpu.pipeline_mode<synchronous>, transform_indices = @transform_1, window_bounds = array<i64: 16, 16>}, {pipeline_mode = #tpu.pipeline_mode<synchronous>, transform_indices = @transform_2, window_bounds = array<i64: 2, 16>}, {transform_indices = @transform_3, window_bounds = array<i64: 8, 16>}]} {
    %c0 = arith.constant 0 : index
    %c0_0 = arith.constant 0 : index
    %0 = vector.load %arg1[%c0, %c0_0] : memref<8x16xf32, #tpu.memory_space<vmem>>, vector<8x16xf32>
    %cst = arith.constant dense<0.000000e+00> : vector<8xf32>
    %1 = vector.multi_reduction <add>, %0, %cst [1] : vector<8x16xf32> to vector<8xf32>
    %2 = vector.shape_cast %1 : vector<8xf32> to vector<8x1xf32>
    %cst_1 = arith.constant 6.250000e-02 : f32
    %3 = vector.broadcast %cst_1 : f32 to vector<8x1xf32>
    %4 = arith.mulf %2, %3 : vector<8x1xf32>
    %5 = vector.broadcast %4 : vector<8x1xf32> to vector<8x16xf32>
    %6 = arith.subf %0, %5 : vector<8x16xf32>
    %7 = arith.mulf %6, %6 : vector<8x16xf32>
    %cst_2 = arith.constant dense<0.000000e+00> : vector<8xf32>
    %8 = vector.multi_reduction <add>, %7, %cst_2 [1] : vector<8x16xf32> to vector<8xf32>
    %9 = vector.shape_cast %8 : vector<8xf32> to vector<8x1xf32>
    %cst_3 = arith.constant 0.0666666701 : f32
    %10 = vector.broadcast %cst_3 : f32 to vector<8x1xf32>
    %11 = arith.mulf %9, %10 : vector<8x1xf32>
    %12 = math.sqrt %11 : vector<8x1xf32>
    %c0_4 = arith.constant 0 : index
    %c0_5 = arith.constant 0 : index
    %13 = vector.load %arg2[%c0_4, %c0_5] : memref<16x16xf32, #tpu.memory_space<vmem>>, vector<16x16xf32>
    %cst_6 = arith.constant dense<0.000000e+00> : vector<8x16xf32>
    %14 = tpu.matmul %0, %13, %cst_6 {dimension_numbers = #tpu.dot_dimension_numbers<[1], [0], [0], [1], [0, 0, 1, 1], [], []>} : vector<8x16xf32>, vector<16x16xf32>, vector<8x16xf32> -> vector<8x16xf32>
    %c0_7 = arith.constant 0 : index
    %c0_8 = arith.constant 0 : index
    %15 = vector.load %arg3[%c0_7, %c0_8] : memref<2x16xf32, #tpu.memory_space<vmem>>, vector<1x16xf32>
    %16 = vector.broadcast %4 : vector<8x1xf32> to vector<8x16xf32>
    %17 = vector.broadcast %15 : vector<1x16xf32> to vector<8x16xf32>
    %18 = arith.mulf %16, %17 : vector<8x16xf32>
    %19 = arith.addf %14, %18 : vector<8x16xf32>
    %c1 = arith.constant 1 : index
    %c0_9 = arith.constant 0 : index
    %20 = vector.load %arg3[%c1, %c0_9] : memref<2x16xf32, #tpu.memory_space<vmem>>, vector<1x16xf32>
    %21 = vector.broadcast %12 : vector<8x1xf32> to vector<8x16xf32>
    %22 = vector.broadcast %20 : vector<1x16xf32> to vector<8x16xf32>
    %23 = arith.mulf %21, %22 : vector<8x16xf32>
    %24 = arith.addf %19, %23 : vector<8x16xf32>
    %c0_10 = arith.constant 0 : index
    %c0_11 = arith.constant 0 : index
    %25 = vector.load %arg4[%c0_10, %c0_11] : memref<8x16xf32, #tpu.memory_space<vmem>>, vector<8x16xf32>
    tpu.vector_store %arg4[%c0_10, %c0_11], %24 {strides = array<i32>} : memref<8x16xf32, #tpu.memory_space<vmem>>, vector<8x16xf32>,
    return
  }
  func.func @transform_0(%arg0: i32) -> (i32, i32) {
    %c0_i32 = arith.constant 0 : i32
    %c0_i32_0 = arith.constant 0 : i32
    return %arg0, %c0_i32 : i32, i32
  }
  func.func @transform_1(%arg0: i32) -> (i32, i32) {
    %c0_i32 = arith.constant 0 : i32
    %c0_i32_0 = arith.constant 0 : i32
    %c0_i32_1 = arith.constant 0 : i32
    return %c0_i32, %c0_i32_0 : i32, i32
  }
  func.func @transform_2(%arg0: i32) -> (i32, i32) {
    %c0_i32 = arith.constant 0 : i32
    %c0_i32_0 = arith.constant 0 : i32
    %c0_i32_1 = arith.constant 0 : i32
    return %c0_i32, %c0_i32_0 : i32, i32
  }
  func.func @transform_3(%arg0: i32) -> (i32, i32) {
    %c0_i32 = arith.constant 0 : i32
    %c0_i32_0 = arith.constant 0 : i32
    return %arg0, %c0_i32 : i32, i32
  }
}

</mosaic_0001>

<llo_original>
// kernel: model_forward.1
$region0: #{model_forward.1}
  #allocation0 [shape = 'u32[]', space=smem, size = 0x4, offset = 0x4, fixed_abs, tag = 'smem constant byte address 0x4 - core index']
  #allocation1 [shape = 'u32[144,128]{1,0:T(1,128)}', space=vmem, size = 0x12000, scoped, tag = 'internal scratch']
  %s0 = inlined_call_operand.vmem [shape: f32[8,16], index: 0, kind: input, shape index: {}]
  %s1 = inlined_call_operand.vmem [shape: f32[16,16], index: 1, kind: input, shape index: {}]
  %s2 = inlined_call_operand.vmem [shape: f32[2,16], index: 2, kind: input, shape index: {}]
  %s3 = inlined_call_operand.hbm [shape: f32[8,16], index: 3, kind: output, shape index: {}]
  %s4 = sld [smem:[#allocation0]]
  $region22: #{model_forward.1} parent=0
    _
  %s6 = ssub.s32 1, %s4
  %s7 = scalar_select 0, %s6, %s4
  $region1: #{model_forward.1} parent=0
    #allocation2 [shape = 'u8[4096]{0}', space=vmem, size = 0x1000, scoped, tag = 'output window, operand 0, single buffered']
    #allocation3 [shape = 's32[1]{0}', space=sflag, size = 0x4, scoped, tag = 'scoped memory for model_forward.1']
    %8 = vsyncpa [#allocation3], 0
    // Predicated region
    $region2: #{model_forward.1} parent=1 // pred_check
      _
    $region3: #{model_forward.1} parent=1 // pred_check_branch
      %10 = sbr.rel (0) target = $region5
    $region4: #{model_forward.1} parent=1 // pred_region
      _
    $region5: #{model_forward.1} parent=1 // pred_fallthru
      _
    // Predicated region
    $region6: #{model_forward.1} parent=1 // pred_check
      _
    $region7: #{model_forward.1} parent=1 // pred_check_branch
      %12 = sbr.rel (0) target = $region9
    $region8: #{model_forward.1} parent=1 // pred_region
      _
    $region9: #{model_forward.1} parent=1 // pred_fallthru
      _
    // Predicated region
    $region10: #{model_forward.1} parent=1 // pred_check
      _
    $region11: #{model_forward.1} parent=1 // pred_check_branch
      %14 = sbr.rel (0) target = $region13
    $region12: #{model_forward.1} parent=1 // pred_region
      _
    $region13: #{model_forward.1} parent=1 // pred_fallthru
      _
    %v15 = vld [vmem:[%s0] sm:$0xff]
    %vm16 = vcmask 130048
    %v17 = vsel %vm16, %v15, 0.0
    %18 = vadd.xlane.f32.xlu0 %v17
    %v19 = vpop.xlane.xlu0 %18
    %v20 = vmul.f32 %v19, 0.0625
    %v21 = vsub.f32 %v15, %v20
    %v22 = vmul.f32 %v21, %v21
    %v23 = vsel %vm16, %v22, 0.0
    %24 = vadd.xlane.f32.xlu0 %v23
    %v25 = vpop.xlane.xlu0 %24
    %v26 = vmul.f32 %v25, 0.06666667
    %v27 = vrsqrt.pop %v26
    %v28 = vmul.f32 %v26, %v27
    %vm29 = vcmp.eq.f32.partialorder %v26, inf
    %v30 = vsel %vm29, %v26, %v28
    %vm31 = vcmp.eq.f32.partialorder %v26, 0.0
    %v32 = vand.u32 %v26, 2147483648
    %v33 = vsel %vm31, %v32, %v30
    %v34 = vld [vmem:[%s1] sm:$0xff]
    %v35 = vld [vmem:[%s1 + $0x8] sm:$0xff]
    %v36 = vld [vmem:[%s2] sm:$0x1]
    %v37 = vlaneseq
    %v38 = vshrl.u32 %v37, 7
    %v39 = vsub.s32 0, %v38
    %v40 = vrot.slane %v36, %v39
    %v41 = vmul.f32 %v20, %v40
    %v43 = vsel %vm16, %v15, 0
    %45 = vmatprep.subr.mxu0 0.0
    %46 = vmatpush1.msra.mxu0 0.0
    %47 = vmatprep.subr.mxu0 0.0
    %48 = vmatpush1.msra.mxu0 0.0
    %49 = vmatprep.subr.mxu0 0.0
    %50 = vmatpush1.msra.mxu0 0.0
    %51 = vmatprep.subr.mxu0 0.0
    %52 = vmatpush1.msra.mxu0 0.0
    %53 = vmatprep.subr.mxu0 0.0
    %54 = vmatpush1.msra.mxu0 0.0
    %55 = vmatprep.subr.mxu0 0.0
    %56 = vmatpush1.msra.mxu0 0.0
    %57 = vmatprep.subr.mxu0 0.0
    %58 = vmatpush1.msra.mxu0 0.0
    %59 = vmatprep.subr.mxu0 0.0
    %60 = vmatpush1.msra.mxu0 0.0
    %61 = vmatprep.subr.mxu0 0.0
    %62 = vmatpush1.msra.mxu0 0.0
    %63 = vmatprep.subr.mxu0 0.0
    %64 = vmatpush1.msra.mxu0 0.0
    %65 = vmatprep.subr.mxu0 0.0
    %66 = vmatpush1.msra.mxu0 0.0
    %67 = vmatprep.subr.mxu0 0.0
    %68 = vmatpush1.msra.mxu0 0.0
    %69 = vmatprep.subr.mxu0 0.0
    %70 = vmatpush1.msra.mxu0 0.0
    %71 = vmatprep.subr.mxu0 0.0
    %72 = vmatpush1.msra.mxu0 0.0
    %73 = vmatprep.subr.mxu0 0.0
    %74 = vmatpush1.msra.mxu0 %v35
    %75 = vmatprep.subr.mxu0 0.0
    %76 = vmatpush1.msra.mxu0 %v34
    %77 = vmatprep.subr.mxu0 0.0
    %78 = vmatpush2.msra.mxu0 0.0
    %79 = vmatprep.subr.mxu0 0.0
    %80 = vmatpush2.msra.mxu0 0.0
    %81 = vmatprep.subr.mxu0 0.0
    %82 = vmatpush2.msra.mxu0 0.0
    %83 = vmatprep.subr.mxu0 0.0
    %84 = vmatpush2.msra.mxu0 0.0
    %85 = vmatprep.subr.mxu0 0.0
    %86 = vmatpush2.msra.mxu0 0.0
    %87 = vmatprep.subr.mxu0 0.0
    %88 = vmatpush2.msra.mxu0 0.0
    %89 = vmatprep.subr.mxu0 0.0
    %90 = vmatpush2.msra.mxu0 0.0
    %91 = vmatprep.subr.mxu0 0.0
    %92 = vmatpush2.msra.mxu0 0.0
    %93 = vmatprep.subr.mxu0 0.0
    %94 = vmatpush2.msra.mxu0 0.0
    %95 = vmatprep.subr.mxu0 0.0
    %96 = vmatpush2.msra.mxu0 0.0
    %97 = vmatprep.subr.mxu0 0.0
    %98 = vmatpush2.msra.mxu0 0.0
    %99 = vmatprep.subr.mxu0 0.0
    %100 = vmatpush2.msra.mxu0 0.0
    %101 = vmatprep.subr.mxu0 0.0
    %102 = vmatpush2.msra.mxu0 0.0
    %103 = vmatprep.subr.mxu0 0.0
    %104 = vmatpush2.msra.mxu0 0.0
    %105 = vmatprep.subr.mxu0 0.0
    %106 = vmatpush2.msra.mxu0 0.0
    %107 = vmatprep.subr.mxu0 0.0
    %108 = vmatpush2.msra.mxu0 0.0
    %109 = vmatprep.mubr.f32.mxu0 0.0
    %110 = vmatmul.mubr.f32.gmra.mxu0 %v43
    %v111 = vpop.f32.mrf.mxu0
    %v112 = vadd.f32 %v41, %v111
    %v113 = vpop.f32.mrf.mxu0
    %114 = vdwg.mxu0
    %v115 = vld [vmem:[%s2 + $0x1] sm:$0x1]
    %v116 = vlaneseq
    %v117 = vshrl.u32 %v116, 7
    %v118 = vsub.s32 0, %v117
    %v119 = vrot.slane %v115, %v118
    %v120 = vmul.f32 %v33, %v119
    %v121 = vadd.f32 %v112, %v120
    %122 = vst.msk [vmem:[#allocation2] sm:$0xff] %vm16, %v121
    // Predicated region
    $region14: #{model_forward.1} parent=1 // pred_check
      _
    $region15: #{model_forward.1} parent=1 // pred_check_branch
      %124 = sbr.rel (0) target = $region17
    $region16: #{model_forward.1} parent=1 // pred_region
      %s126 = ssub.s32 128, 128
      %127 = vsyncadd [#allocation3], %s126
      %s129 = sshll.u32 [#allocation2], 4
      %s130 = int_to_ptr.vmem [resolvable:$true] %s129
      %132 = dma.vmem_to_hbm [thread:$0]  %s130, 128, %s3, [#allocation3]
    $region17: #{model_forward.1} parent=1 // pred_fallthru
      _
    // Predicated region
    $region18: #{model_forward.1} parent=1 // pred_check
      _
    $region19: #{model_forward.1} parent=1 // pred_check_branch
      %134 = sbr.rel (0) target = $region21
    $region20: #{model_forward.1} parent=1 // pred_region
      %135 = dma.done [#allocation3], 128
    $region21: #{model_forward.1} parent=1 // pred_fallthru
      _
    %136 = vsyncpa [#allocation3], 1

</llo_original>
